<compile_context>
chip_gen: v7x
topology: tpu7x:2x2x1
jax: 0.10.0
libtpu: 0.0.40
codegen_flags: <defaults>
</compile_context>

<pallas_src>
import math

import jax
import jax.numpy as jnp
from jax.experimental import pallas as pl
from jax.experimental.pallas import tpu as pltpu


def _fourier_kernel(x_ref, b_ref, o_ref):
    # x_ref: (tn, D) tile of points; b_ref: (D, M) projection matrix (2*pi pre-folded)
    # o_ref: (tn, 2M) output tile -> [sin | cos]
    M = b_ref.shape[1]
    x_proj = jnp.dot(x_ref[...], b_ref[...], preferred_element_type=jnp.float32)
    o_ref[:, :M] = jnp.sin(x_proj).astype(o_ref.dtype)
    o_ref[:, M:] = jnp.cos(x_proj).astype(o_ref.dtype)


def fourier_feature_mapping(x, B, *, tile_n=2048):
    """x: (..., input_dim); B: (input_dim, mapping_size) -> (..., 2*mapping_size)"""
    orig_shape = x.shape
    D = orig_shape[-1]
    M = B.shape[1]
    x2d = x.reshape(-1, D).astype(jnp.float32)
    N = x2d.shape[0]

    # Fold the 2*pi scale into the (tiny) projection matrix once, outside the kernel.
    B2 = (2.0 * math.pi) * B.astype(jnp.float32)

    # Effective row tile:
    #  - if the whole problem fits in one tile, use the full row count (block dim
    #    equal to the full array dim is always legal, no padding needed),
    #  - otherwise use tile_n (multiple of 8); a non-divisible N just produces a
    #    masked partial tail block -- no host-side pad / slice copies.
    if N <= tile_n:
        tn = N
    else:
        tn = tile_n
    grid = (pl.cdiv(N, tn),)

    out = pl.pallas_call(
        _fourier_kernel,
        out_shape=jax.ShapeDtypeStruct((N, 2 * M), jnp.float32),
        grid_spec=pltpu.PrefetchScalarGridSpec(
            num_scalar_prefetch=0,
            grid=grid,
            in_specs=[
                pl.BlockSpec((tn, D), lambda i: (i, 0)),
                pl.BlockSpec((D, M), lambda i: (0, 0)),
            ],
            out_specs=pl.BlockSpec((tn, 2 * M), lambda i: (i, 0)),
        ),
        compiler_params=pltpu.CompilerParams(
            dimension_semantics=("parallel",)
        ),
    )(x2d, B2)

    return out.reshape(*orig_shape[:-1], 2 * M)


if __name__ == "__main__":
    input_dim = 3
    mapping_size = 16
    scale = 10.0

    key = jax.random.PRNGKey(0)
    k_b, k_x, k_x2 = jax.random.split(key, 3)

    # Deterministic "registered buffer" B ~ N(0,1) * scale, shape (input_dim, mapping_size)
    B = jax.random.normal(k_b, (input_dim, mapping_size), dtype=jnp.float32) * scale

    # Small example input: batch of 16 points with 3 coordinates each
    x = jax.random.normal(k_x, (16, input_dim), dtype=jnp.float32)

    out = fourier_feature_mapping(x, B)
    out = jax.block_until_ready(out)

    # Reference check (plain JAX, mirrors the PyTorch forward exactly)
    x_proj_ref = 2.0 * jnp.pi * (x @ B)
    ref = jnp.concatenate([jnp.sin(x_proj_ref), jnp.cos(x_proj_ref)], axis=-1)

    assert out.shape == (16, 2 * mapping_size), out.shape
    assert jnp.allclose(out, ref, atol=1e-3, rtol=1e-3), float(
        jnp.max(jnp.abs(out - ref))
    )

    # Second small check exercising the multi-block + masked tail path
    # (N=20 not a multiple of the tile).
    x_tail = jax.random.normal(k_x2, (20, input_dim), dtype=jnp.float32)
    out_tail = jax.block_until_ready(fourier_feature_mapping(x_tail, B, tile_n=8))
    xp_tail = 2.0 * jnp.pi * (x_tail @ B)
    ref_tail = jnp.concatenate([jnp.sin(xp_tail), jnp.cos(xp_tail)], axis=-1)
    assert out_tail.shape == (20, 2 * mapping_size), out_tail.shape
    assert jnp.allclose(out_tail, ref_tail, atol=1e-3, rtol=1e-3), float(
        jnp.max(jnp.abs(out_tail - ref_tail))
    )

    print("KERNEL_OK")
</pallas_src>

<mosaic_0001>
module attributes {stable_mosaic.version = 11 : i64} {
  func.func @_fourier_kernel(%arg0: i32, %arg1: memref<16x3xf32, #tpu.memory_space<vmem>>, %arg2: memref<3x16xf32, #tpu.memory_space<vmem>>, %arg3: memref<16x32xf32, #tpu.memory_space<vmem>>) attributes {dimension_semantics = [#tpu.dimension_semantics<parallel>], iteration_bounds = array<i64: 1>, scalar_prefetch = 0 : i64, scratch_operands = 0 : i64, tpu.core_type = #tpu.core_type<tc>, window_params = [{transform_indices = @transform_0, window_bounds = array<i64: 16, 3>}, {pipeline_mode = #tpu.pipeline_mode<synchronous>, transform_indices = @transform_1, window_bounds = array<i64: 3, 16>}, {transform_indices = @transform_2, window_bounds = array<i64: 16, 32>}]} {
    %c0 = arith.constant 0 : index
    %c0_0 = arith.constant 0 : index
    %0 = vector.load %arg1[%c0, %c0_0] : memref<16x3xf32, #tpu.memory_space<vmem>>, vector<16x3xf32>
    %c0_1 = arith.constant 0 : index
    %c0_2 = arith.constant 0 : index
    %1 = vector.load %arg2[%c0_1, %c0_2] : memref<3x16xf32, #tpu.memory_space<vmem>>, vector<3x16xf32>
    %cst = arith.constant dense<0.000000e+00> : vector<16x16xf32>
    %2 = tpu.matmul %0, %1, %cst {dimension_numbers = #tpu.dot_dimension_numbers<[1], [0], [0], [1], [0, 0, 1, 1], [], []>} : vector<16x3xf32>, vector<3x16xf32>, vector<16x16xf32> -> vector<16x16xf32>
    %3 = math.sin %2 : vector<16x16xf32>
    %c0_3 = arith.constant 0 : index
    %c0_4 = arith.constant 0 : index
    %4 = vector.load %arg3[%c0_3, %c0_4] : memref<16x32xf32, #tpu.memory_space<vmem>>, vector<16x16xf32>
    tpu.vector_store %arg3[%c0_3, %c0_4], %3 {strides = array<i32>} : memref<16x32xf32, #tpu.memory_space<vmem>>, vector<16x16xf32>,
    %5 = math.cos %2 : vector<16x16xf32>
    %c0_5 = arith.constant 0 : index
    %c16 = arith.constant 16 : index
    %6 = vector.load %arg3[%c0_5, %c16] : memref<16x32xf32, #tpu.memory_space<vmem>>, vector<16x16xf32>
    tpu.vector_store %arg3[%c0_5, %c16], %5 {strides = array<i32>} : memref<16x32xf32, #tpu.memory_space<vmem>>, vector<16x16xf32>,
    return
  }
  func.func @transform_0(%arg0: i32) -> (i32, i32) {
    %c0_i32 = arith.constant 0 : i32
    %c0_i32_0 = arith.constant 0 : i32
    return %arg0, %c0_i32 : i32, i32
  }
  func.func @transform_1(%arg0: i32) -> (i32, i32) {
    %c0_i32 = arith.constant 0 : i32
    %c0_i32_0 = arith.constant 0 : i32
    %c0_i32_1 = arith.constant 0 : i32
    return %c0_i32, %c0_i32_0 : i32, i32
  }
  func.func @transform_2(%arg0: i32) -> (i32, i32) {
    %c0_i32 = arith.constant 0 : i32
    %c0_i32_0 = arith.constant 0 : i32
    return %arg0, %c0_i32 : i32, i32
  }
}

</mosaic_0001>

<llo_original>
// kernel: tpu_custom_call.1
$region0: #{tpu_custom_call.1}
  #allocation0 [shape = 'u32[]', space=smem, size = 0x4, offset = 0x4, fixed_abs, tag = 'smem constant byte address 0x4 - core index']
  #allocation1 [shape = 'u32[144,128]{1,0:T(1,128)}', space=vmem, size = 0x12000, scoped, tag = 'internal scratch']
  %s0 = inlined_call_operand.vmem [shape: f32[16,3], index: 0, kind: input, shape index: {}]
  %s1 = inlined_call_operand.vmem [shape: f32[3,16], index: 1, kind: input, shape index: {}]
  %s2 = inlined_call_operand.hbm [shape: f32[16,32], index: 2, kind: output, shape index: {}]
  %s3 = sld [smem:[#allocation0]]
  $region18: #{tpu_custom_call.1} parent=0
    _
  %s5 = ssub.s32 1, %s3
  %s6 = scalar_select 0, %s5, %s3
  $region1: #{tpu_custom_call.1} parent=0
    #allocation2 [shape = 'u8[8192]{0}', space=vmem, size = 0x2000, scoped, tag = 'output window, operand 0, single buffered']
    #allocation3 [shape = 's32[1]{0}', space=sflag, size = 0x4, scoped, tag = 'scoped memory for tpu_custom_call.1']
    %7 = vsyncpa [#allocation3], 0
    // Predicated region
    $region2: #{tpu_custom_call.1} parent=1 // pred_check
      _
    $region3: #{tpu_custom_call.1} parent=1 // pred_check_branch
      %9 = sbr.rel (0) target = $region5
    $region4: #{tpu_custom_call.1} parent=1 // pred_region
      _
    $region5: #{tpu_custom_call.1} parent=1 // pred_fallthru
      _
    // Predicated region
    $region6: #{tpu_custom_call.1} parent=1 // pred_check
      _
    $region7: #{tpu_custom_call.1} parent=1 // pred_check_branch
      %11 = sbr.rel (0) target = $region9
    $region8: #{tpu_custom_call.1} parent=1 // pred_region
      _
    $region9: #{tpu_custom_call.1} parent=1 // pred_fallthru
      _
    %v12 = vld [vmem:[%s0] sm:$0xff]
    %v13 = vld [vmem:[%s0 + $0x8] sm:$0xff]
    %v14 = vld [vmem:[%s1] sm:$0x7]
    %vm15 = vcmask 23552
    %v17 = vsel %vm15, %v12, 0
    %v20 = vsel %vm15, %v13, 0
    %vm22 = vcmask 1042432
    %v24 = vsel %vm22, %v14, 0
    %26 = vmatprep.subr.mxu0 0.0
    %27 = vmatpush1.msra.mxu0 %v24
    %28 = vmatprep.subr.mxu0 0.0
    %29 = vmatpush1.msra.mxu0 0.0
    %30 = vmatprep.subr.mxu0 0.0
    %31 = vmatpush1.msra.mxu0 0.0
    %32 = vmatprep.subr.mxu0 0.0
    %33 = vmatpush1.msra.mxu0 0.0
    %34 = vmatprep.subr.mxu0 0.0
    %35 = vmatpush1.msra.mxu0 0.0
    %36 = vmatprep.subr.mxu0 0.0
    %37 = vmatpush1.msra.mxu0 0.0
    %38 = vmatprep.subr.mxu0 0.0
    %39 = vmatpush1.msra.mxu0 0.0
    %40 = vmatprep.subr.mxu0 0.0
    %41 = vmatpush1.msra.mxu0 0.0
    %42 = vmatprep.subr.mxu0 0.0
    %43 = vmatpush1.msra.mxu0 0.0
    %44 = vmatprep.subr.mxu0 0.0
    %45 = vmatpush1.msra.mxu0 0.0
    %46 = vmatprep.subr.mxu0 0.0
    %47 = vmatpush1.msra.mxu0 0.0
    %48 = vmatprep.subr.mxu0 0.0
    %49 = vmatpush1.msra.mxu0 0.0
    %50 = vmatprep.subr.mxu0 0.0
    %51 = vmatpush1.msra.mxu0 0.0
    %52 = vmatprep.subr.mxu0 0.0
    %53 = vmatpush1.msra.mxu0 0.0
    %54 = vmatprep.subr.mxu0 0.0
    %55 = vmatpush1.msra.mxu0 0.0
    %56 = vmatprep.subr.mxu0 0.0
    %57 = vmatpush1.msra.mxu0 0.0
    %58 = vmatprep.subr.mxu0 0.0
    %59 = vmatpush1.msra.mxu0 0.0
    %60 = vmatprep.subr.mxu0 0.0
    %61 = vmatpush1.msra.mxu0 0.0
    %62 = vmatprep.subr.mxu0 0.0
    %63 = vmatpush1.msra.mxu0 0.0
    %64 = vmatprep.subr.mxu0 0.0
    %65 = vmatpush1.msra.mxu0 0.0
    %66 = vmatprep.subr.mxu0 0.0
    %67 = vmatpush1.msra.mxu0 0.0
    %68 = vmatprep.subr.mxu0 0.0
    %69 = vmatpush1.msra.mxu0 0.0
    %70 = vmatprep.subr.mxu0 0.0
    %71 = vmatpush1.msra.mxu0 0.0
    %72 = vmatprep.subr.mxu0 0.0
    %73 = vmatpush1.msra.mxu0 0.0
    %74 = vmatprep.subr.mxu0 0.0
    %75 = vmatpush1.msra.mxu0 0.0
    %76 = vmatprep.subr.mxu0 0.0
    %77 = vmatpush1.msra.mxu0 0.0
    %78 = vmatprep.subr.mxu0 0.0
    %79 = vmatpush1.msra.mxu0 0.0
    %80 = vmatprep.subr.mxu0 0.0
    %81 = vmatpush1.msra.mxu0 0.0
    %82 = vmatprep.subr.mxu0 0.0
    %83 = vmatpush1.msra.mxu0 0.0
    %84 = vmatprep.subr.mxu0 0.0
    %85 = vmatpush1.msra.mxu0 0.0
    %86 = vmatprep.subr.mxu0 0.0
    %87 = vmatpush1.msra.mxu0 0.0
    %88 = vmatprep.subr.mxu0 0.0
    %89 = vmatpush1.msra.mxu0 0.0
    %90 = vmatprep.mubr.f32.mxu0 0.0
    %91 = vmatmul.mubr.f32.gmra.mrb[0].mxu0 %v17
    %v92 = vpop.f32.mrb[0].mxu0
    %v93 = vadd.f32 0.0, %v92
    %v94 = vpop.f32.mrb[0].mxu0
    %95 = vmatprep.mubr.f32.mxu0 0.0
    %96 = vmatmul.mubr.f32.gmra.mrb[0].mxu0 %v20
    %v97 = vpop.f32.mrb[0].mxu0
    %v98 = vadd.f32 0.0, %v97
    %v99 = vpop.f32.mrb[0].mxu0
    %100 = vdwg.mxu0
    %v101 = vand.u32 2147483647, %v93
    %vm102 = vcmp.le.f32.partialorder %v101, 0.7853982
    %vm103 = vcmp.lt.s32.totalorder %v93, 0
    %v104 = vand.u32 %v93, 2139095040
    %v105 = vshrl.u32 %v104, 23
    %v106 = vsub.s32 %v105, 127
    %v107 = vand.u32 2147483647, %v93
    %v108 = vand.u32 %v107, 8388607
    %v109 = vor.u32 %v108, 8388608
    %v110 = vsub.s32 0, %v109
    %v111 = vadd.s32 %v106, 1
    %vm112 = vcmp.gt.s32.totalorder %v111, 0
    %v113 = vsel %vm112, %v111, 0
    %v114 = vshrl.u32 %v113, 5
    %v115 = vand.u32 %v113, 31
    %v116 = vsub.s32 32, %v115
    %v117 = vshrl.u32 683565275, %v116
    %v118 = vshll.u32 683565275, %v115
    %v119 = vshrl.u32 2475754826, %v116
    %v120 = vor.u32 %v118, %v119
    %v121 = vshll.u32 2475754826, %v115
    %v122 = vshrl.u32 2131351028, %v116
    %v123 = vor.u32 %v121, %v122
    %v124 = vshll.u32 2131351028, %v115
    %v125 = vshrl.u32 2102212464, %v116
    %v126 = vor.u32 %v124, %v125
    %v127 = vshll.u32 2102212464, %v115
    %v128 = vshrl.u32 920167782, %v116
    %v129 = vor.u32 %v127, %v128
    %v130 = vshll.u32 920167782, %v115
    %v131 = vshrl.u32 1326507024, %v116
    %v132 = vor.u32 %v130, %v131
    %vm133 = vcmp.lt.s32.totalorder %v114, 1
    %vm134 = vcmp.lt.s32.totalorder %v114, 2
    %vm135 = vcmp.lt.s32.totalorder %v114, 3
    %vm136 = vcmp.lt.s32.totalorder %v114, 4
    %v137 = vsel %vm133, %v117, %v120
    %v138 = vsel %vm136, %v126, 2102212464
    %v139 = vsel %vm135, %v123, %v138
    %v140 = vsel %vm134, %v137, %v139
    %v141 = vsel %vm133, %v120, %v123
    %v142 = vsel %vm136, %v129, 920167782
    %v143 = vsel %vm135, %v126, %v142
    %v144 = vsel %vm134, %v141, %v143
    %v145 = vsel %vm133, %v123, %v126
    %v146 = vsel %vm136, %v132, 1326507024
    %v147 = vsel %vm135, %v129, %v146
    %v148 = vsel %vm134, %v145, %v147
    %v149 = vshll.u32 %v109, 8
    %v150 = vmul.u32.u64.compose %v149, %v148
    %v151 = vextract.low.u32 %v150
    %v152 = vextract.high.u32 %v150
    %v153 = vmul.u32.u64.compose %v149, %v144
    %v154 = vextract.low.u32 %v153
    %v155 = vextract.high.u32 %v153
    %v156 = vmul.u32 %v149, %v140
    %v157 = vadd.s32 %v152, %v154
    %vm158 = vc.u32 %v152, %v154
    %v159 = vadd.s32 %v155, 1
    %v160 = vsel %vm158, %v159, %v155
    %v161 = vadd.s32 %v156, %v160
    %v162 = vadd.s32 %v161, 536870912
    %v163 = vshrl.u32 %v162, 30
    %v164 = vshll.u32 %v163, 30
    %v165 = vsub.s32 %v161, %v164
    %vm166 = vcmp.lt.s32.totalorder %v165, 0
    %v167 = vsub.s32 0, %v165
    %v168 = vsel %vm166, %v167, %v165
    %v169 = vclz %v168
    %v170 = vsub.s32 %v169, 2
    %vm171 = vcmp.gt.s32.totalorder 0, %v170
    %v172 = vsel %vm171, 0, %v170
    %v173 = vsub.s32 32, %v172
    %v174 = vshll.u32 %v165, %v172
    %v175 = vshrl.u32 %v157, %v173
    %v176 = vor.u32 %v174, %v175
    %v177 = vsub.s32 4294967266, %v172
    %v178 = vadd.s32 %v177, 127
    %v179 = vshll.u32 %v178, 23
    %v180 = vor.u32 4788187, %v179
    %v181 = vand.u32 2147483647, %v180
    %v183 = vcvt.s32.f32 %v176
    %v184 = vmul.f32 %v183, %v181
    %v185 = vxor.u32 %v184, 2147483648
    %v186 = vsel %vm103, %v185, %v184
    %v187 = vsub.s32 4, %v163
    %v188 = vsel %vm103, %v187, %v163
    %v189 = vsel %vm102, %v93, %v186
    %v190 = vsel %vm102, 0, %v188
    %v191 = vcosq.f32.pop %v189
    %v192 = vsinq.f32.pop %v189
    %vm193 = vweird.f32 %v93
    %v194 = vadd.s32 %v190, 3
    %v195 = vand.u32 %v194, 3
    %vm196 = vcmp.lt.s32.totalorder %v195, 2
    %vm197 = vcmp.eq.s32.totalorder %v195, 0
    %v198 = vxor.u32 %v192, 2147483648
    %v199 = vsel %vm197, %v191, %v198
    %vm200 = vcmp.eq.s32.totalorder %v195, 2
    %v201 = vxor.u32 %v191, 2147483648
    %v202 = vsel %vm200, %v201, %v192
    %v203 = vsel %vm196, %v199, %v202
    %v204 = vsel %vm193, nan, %v203
    %v205 = vand.u32 2147483647, %v98
    %vm206 = vcmp.le.f32.partialorder %v205, 0.7853982
    %vm207 = vcmp.lt.s32.totalorder %v98, 0
    %v208 = vand.u32 %v98, 2139095040
    %v209 = vshrl.u32 %v208, 23
    %v210 = vsub.s32 %v209, 127
    %v211 = vand.u32 2147483647, %v98
    %v212 = vand.u32 %v211, 8388607
    %v213 = vor.u32 %v212, 8388608
    %v214 = vsub.s32 0, %v213
    %v215 = vadd.s32 %v210, 1
    %vm216 = vcmp.gt.s32.totalorder %v215, 0
    %v217 = vsel %vm216, %v215, 0
    %v218 = vshrl.u32 %v217, 5
    %v219 = vand.u32 %v217, 31
    %v220 = vsub.s32 32, %v219
    %v221 = vshrl.u32 683565275, %v220
    %v222 = vshll.u32 683565275, %v219
    %v223 = vshrl.u32 2475754826, %v220
    %v224 = vor.u32 %v222, %v223
    %v225 = vshll.u32 2475754826, %v219
    %v226 = vshrl.u32 2131351028, %v220
    %v227 = vor.u32 %v225, %v226
    %v228 = vshll.u32 2131351028, %v219
    %v229 = vshrl.u32 2102212464, %v220
    %v230 = vor.u32 %v228, %v229
    %v231 = vshll.u32 2102212464, %v219
    %v232 = vshrl.u32 920167782, %v220
    %v233 = vor.u32 %v231, %v232
    %v234 = vshll.u32 920167782, %v219
    %v235 = vshrl.u32 1326507024, %v220
    %v236 = vor.u32 %v234, %v235
    %vm237 = vcmp.lt.s32.totalorder %v218, 1
    %vm238 = vcmp.lt.s32.totalorder %v218, 2
    %vm239 = vcmp.lt.s32.totalorder %v218, 3
    %vm240 = vcmp.lt.s32.totalorder %v218, 4
    %v241 = vsel %vm237, %v221, %v224
    %v242 = vsel %vm240, %v230, 2102212464
    %v243 = vsel %vm239, %v227, %v242
    %v244 = vsel %vm238, %v241, %v243
    %v245 = vsel %vm237, %v224, %v227
    %v246 = vsel %vm240, %v233, 920167782
    %v247 = vsel %vm239, %v230, %v246
    %v248 = vsel %vm238, %v245, %v247
    %v249 = vsel %vm237, %v227, %v230
    %v250 = vsel %vm240, %v236, 1326507024
    %v251 = vsel %vm239, %v233, %v250
    %v252 = vsel %vm238, %v249, %v251
    %v253 = vshll.u32 %v213, 8
    %v254 = vmul.u32.u64.compose %v253, %v252
    %v255 = vextract.low.u32 %v254
    %v256 = vextract.high.u32 %v254
    %v257 = vmul.u32.u64.compose %v253, %v248
    %v258 = vextract.low.u32 %v257
    %v259 = vextract.high.u32 %v257
    %v260 = vmul.u32 %v253, %v244
    %v261 = vadd.s32 %v256, %v258
    %vm262 = vc.u32 %v256, %v258
    %v263 = vadd.s32 %v259, 1
    %v264 = vsel %vm262, %v263, %v259
    %v265 = vadd.s32 %v260, %v264
    %v266 = vadd.s32 %v265, 536870912
    %v267 = vshrl.u32 %v266, 30
    %v268 = vshll.u32 %v267, 30
    %v269 = vsub.s32 %v265, %v268
    %vm270 = vcmp.lt.s32.totalorder %v269, 0
    %v271 = vsub.s32 0, %v269
    %v272 = vsel %vm270, %v271, %v269
    %v273 = vclz %v272
    %v274 = vsub.s32 %v273, 2
    %vm275 = vcmp.gt.s32.totalorder 0, %v274
    %v276 = vsel %vm275, 0, %v274
    %v277 = vsub.s32 32, %v276
    %v278 = vshll.u32 %v269, %v276
    %v279 = vshrl.u32 %v261, %v277
    %v280 = vor.u32 %v278, %v279
    %v281 = vsub.s32 4294967266, %v276
    %v282 = vadd.s32 %v281, 127
    %v283 = vshll.u32 %v282, 23
    %v284 = vor.u32 4788187, %v283
    %v285 = vand.u32 2147483647, %v284
    %v287 = vcvt.s32.f32 %v280
    %v288 = vmul.f32 %v287, %v285
    %v289 = vxor.u32 %v288, 2147483648
    %v290 = vsel %vm207, %v289, %v288
    %v291 = vsub.s32 4, %v267
    %v292 = vsel %vm207, %v291, %v267
    %v293 = vsel %vm206, %v98, %v290
    %v294 = vsel %vm206, 0, %v292
    %v295 = vcosq.f32.pop %v293
    %v296 = vsinq.f32.pop %v293
    %vm297 = vweird.f32 %v98
    %v298 = vadd.s32 %v294, 3
    %v299 = vand.u32 %v298, 3
    %vm300 = vcmp.lt.s32.totalorder %v299, 2
    %vm301 = vcmp.eq.s32.totalorder %v299, 0
    %v302 = vxor.u32 %v296, 2147483648
    %v303 = vsel %vm301, %v295, %v302
    %vm304 = vcmp.eq.s32.totalorder %v299, 2
    %v305 = vxor.u32 %v295, 2147483648
    %v306 = vsel %vm304, %v305, %v296
    %v307 = vsel %vm300, %v303, %v306
    %v308 = vsel %vm297, nan, %v307
    %vm309 = vcmask 130048
    %310 = vst.msk [vmem:[#allocation2] sm:$0xff] %vm309, %v204
    %311 = vst.msk [vmem:[#allocation2 + $0x8] sm:$0xff] %vm309, %v308
    %v312 = vand.u32 2147483647, %v93
    %vm313 = vcmp.le.f32.partialorder %v312, 0.7853982
    %vm314 = vcmp.lt.s32.totalorder %v93, 0
    %v315 = vand.u32 %v93, 2139095040
    %v316 = vshrl.u32 %v315, 23
    %v317 = vsub.s32 %v316, 127
    %v318 = vand.u32 2147483647, %v93
    %v319 = vand.u32 %v318, 8388607
    %v320 = vor.u32 %v319, 8388608
    %v321 = vsub.s32 0, %v320
    %v322 = vadd.s32 %v317, 1
    %vm323 = vcmp.gt.s32.totalorder %v322, 0
    %v324 = vsel %vm323, %v322, 0
    %v325 = vshrl.u32 %v324, 5
    %v326 = vand.u32 %v324, 31
    %v327 = vsub.s32 32, %v326
    %v328 = vshrl.u32 683565275, %v327
    %v329 = vshll.u32 683565275, %v326
    %v330 = vshrl.u32 2475754826, %v327
    %v331 = vor.u32 %v329, %v330
    %v332 = vshll.u32 2475754826, %v326
    %v333 = vshrl.u32 2131351028, %v327
    %v334 = vor.u32 %v332, %v333
    %v335 = vshll.u32 2131351028, %v326
    %v336 = vshrl.u32 2102212464, %v327
    %v337 = vor.u32 %v335, %v336
    %v338 = vshll.u32 2102212464, %v326
    %v339 = vshrl.u32 920167782, %v327
    %v340 = vor.u32 %v338, %v339
    %v341 = vshll.u32 920167782, %v326
    %v342 = vshrl.u32 1326507024, %v327
    %v343 = vor.u32 %v341, %v342
    %vm344 = vcmp.lt.s32.totalorder %v325, 1
    %vm345 = vcmp.lt.s32.totalorder %v325, 2
    %vm346 = vcmp.lt.s32.totalorder %v325, 3
    %vm347 = vcmp.lt.s32.totalorder %v325, 4
    %v348 = vsel %vm344, %v328, %v331
    %v349 = vsel %vm347, %v337, 2102212464
    %v350 = vsel %vm346, %v334, %v349
    %v351 = vsel %vm345, %v348, %v350
    %v352 = vsel %vm344, %v331, %v334
    %v353 = vsel %vm347, %v340, 920167782
    %v354 = vsel %vm346, %v337, %v353
    %v355 = vsel %vm345, %v352, %v354
    %v356 = vsel %vm344, %v334, %v337
    %v357 = vsel %vm347, %v343, 1326507024
    %v358 = vsel %vm346, %v340, %v357
    %v359 = vsel %vm345, %v356, %v358
    %v360 = vshll.u32 %v320, 8
    %v361 = vmul.u32.u64.compose %v360, %v359
    %v362 = vextract.low.u32 %v361
    %v363 = vextract.high.u32 %v361
    %v364 = vmul.u32.u64.compose %v360, %v355
    %v365 = vextract.low.u32 %v364
    %v366 = vextract.high.u32 %v364
    %v367 = vmul.u32 %v360, %v351
    %v368 = vadd.s32 %v363, %v365
    %vm369 = vc.u32 %v363, %v365
    %v370 = vadd.s32 %v366, 1
    %v371 = vsel %vm369, %v370, %v366
    %v372 = vadd.s32 %v367, %v371
    %v373 = vadd.s32 %v372, 536870912
    %v374 = vshrl.u32 %v373, 30
    %v375 = vshll.u32 %v374, 30
    %v376 = vsub.s32 %v372, %v375
    %vm377 = vcmp.lt.s32.totalorder %v376, 0
    %v378 = vsub.s32 0, %v376
    %v379 = vsel %vm377, %v378, %v376
    %v380 = vclz %v379
    %v381 = vsub.s32 %v380, 2
    %vm382 = vcmp.gt.s32.totalorder 0, %v381
    %v383 = vsel %vm382, 0, %v381
    %v384 = vsub.s32 32, %v383
    %v385 = vshll.u32 %v376, %v383
    %v386 = vshrl.u32 %v368, %v384
    %v387 = vor.u32 %v385, %v386
    %v388 = vsub.s32 4294967266, %v383
    %v389 = vadd.s32 %v388, 127
    %v390 = vshll.u32 %v389, 23
    %v391 = vor.u32 4788187, %v390
    %v392 = vand.u32 2147483647, %v391
    %v394 = vcvt.s32.f32 %v387
    %v395 = vmul.f32 %v394, %v392
    %v396 = vxor.u32 %v395, 2147483648
    %v397 = vsel %vm314, %v396, %v395
    %v398 = vsub.s32 4, %v374
    %v399 = vsel %vm314, %v398, %v374
    %v400 = vsel %vm313, %v93, %v397
    %v401 = vsel %vm313, 0, %v399
    %v402 = vcosq.f32.pop %v400
    %v403 = vsinq.f32.pop %v400
    %vm404 = vweird.f32 %v93
    %v405 = vand.u32 %v401, 3
    %vm406 = vcmp.lt.s32.totalorder %v405, 2
    %vm407 = vcmp.eq.s32.totalorder %v405, 0
    %v408 = vxor.u32 %v403, 2147483648
    %v409 = vsel %vm407, %v402, %v408
    %vm410 = vcmp.eq.s32.totalorder %v405, 2
    %v411 = vxor.u32 %v402, 2147483648
    %v412 = vsel %vm410, %v411, %v403
    %v413 = vsel %vm406, %v409, %v412
    %v414 = vsel %vm404, nan, %v413
    %v415 = vand.u32 2147483647, %v98
    %vm416 = vcmp.le.f32.partialorder %v415, 0.7853982
    %vm417 = vcmp.lt.s32.totalorder %v98, 0
    %v418 = vand.u32 %v98, 2139095040
    %v419 = vshrl.u32 %v418, 23
    %v420 = vsub.s32 %v419, 127
    %v421 = vand.u32 2147483647, %v98
    %v422 = vand.u32 %v421, 8388607
    %v423 = vor.u32 %v422, 8388608
    %v424 = vsub.s32 0, %v423
    %v425 = vadd.s32 %v420, 1
    %vm426 = vcmp.gt.s32.totalorder %v425, 0
    %v427 = vsel %vm426, %v425, 0
    %v428 = vshrl.u32 %v427, 5
    %v429 = vand.u32 %v427, 31
    %v430 = vsub.s32 32, %v429
    %v431 = vshrl.u32 683565275, %v430
    %v432 = vshll.u32 683565275, %v429
    %v433 = vshrl.u32 2475754826, %v430
    %v434 = vor.u32 %v432, %v433
    %v435 = vshll.u32 2475754826, %v429
    %v436 = vshrl.u32 2131351028, %v430
    %v437 = vor.u32 %v435, %v436
    %v438 = vshll.u32 2131351028, %v429
    %v439 = vshrl.u32 2102212464, %v430
    %v440 = vor.u32 %v438, %v439
    %v441 = vshll.u32 2102212464, %v429
    %v442 = vshrl.u32 920167782, %v430
    %v443 = vor.u32 %v441, %v442
    %v444 = vshll.u32 920167782, %v429
    %v445 = vshrl.u32 1326507024, %v430
    %v446 = vor.u32 %v444, %v445
    %vm447 = vcmp.lt.s32.totalorder %v428, 1
    %vm448 = vcmp.lt.s32.totalorder %v428, 2
    %vm449 = vcmp.lt.s32.totalorder %v428, 3
    %vm450 = vcmp.lt.s32.totalorder %v428, 4
    %v451 = vsel %vm447, %v431, %v434
    %v452 = vsel %vm450, %v440, 2102212464
    %v453 = vsel %vm449, %v437, %v452
    %v454 = vsel %vm448, %v451, %v453
    %v455 = vsel %vm447, %v434, %v437
    %v456 = vsel %vm450, %v443, 920167782
    %v457 = vsel %vm449, %v440, %v456
    %v458 = vsel %vm448, %v455, %v457
    %v459 = vsel %vm447, %v437, %v440
    %v460 = vsel %vm450, %v446, 1326507024
    %v461 = vsel %vm449, %v443, %v460
    %v462 = vsel %vm448, %v459, %v461
    %v463 = vshll.u32 %v423, 8
    %v464 = vmul.u32.u64.compose %v463, %v462
    %v465 = vextract.low.u32 %v464
    %v466 = vextract.high.u32 %v464
    %v467 = vmul.u32.u64.compose %v463, %v458
    %v468 = vextract.low.u32 %v467
    %v469 = vextract.high.u32 %v467
    %v470 = vmul.u32 %v463, %v454
    %v471 = vadd.s32 %v466, %v468
    %vm472 = vc.u32 %v466, %v468
    %v473 = vadd.s32 %v469, 1
    %v474 = vsel %vm472, %v473, %v469
    %v475 = vadd.s32 %v470, %v474
    %v476 = vadd.s32 %v475, 536870912
    %v477 = vshrl.u32 %v476, 30
    %v478 = vshll.u32 %v477, 30
    %v479 = vsub.s32 %v475, %v478
    %vm480 = vcmp.lt.s32.totalorder %v479, 0
    %v481 = vsub.s32 0, %v479
    %v482 = vsel %vm480, %v481, %v479
    %v483 = vclz %v482
    %v484 = vsub.s32 %v483, 2
    %vm485 = vcmp.gt.s32.totalorder 0, %v484
    %v486 = vsel %vm485, 0, %v484
    %v487 = vsub.s32 32, %v486
    %v488 = vshll.u32 %v479, %v486
    %v489 = vshrl.u32 %v471, %v487
    %v490 = vor.u32 %v488, %v489
    %v491 = vsub.s32 4294967266, %v486
    %v492 = vadd.s32 %v491, 127
    %v493 = vshll.u32 %v492, 23
    %v494 = vor.u32 4788187, %v493
    %v495 = vand.u32 2147483647, %v494
    %v497 = vcvt.s32.f32 %v490
    %v498 = vmul.f32 %v497, %v495
    %v499 = vxor.u32 %v498, 2147483648
    %v500 = vsel %vm417, %v499, %v498
    %v501 = vsub.s32 4, %v477
    %v502 = vsel %vm417, %v501, %v477
    %v503 = vsel %vm416, %v98, %v500
    %v504 = vsel %vm416, 0, %v502
    %v505 = vcosq.f32.pop %v503
    %v506 = vsinq.f32.pop %v503
    %vm507 = vweird.f32 %v98
    %v508 = vand.u32 %v504, 3
    %vm509 = vcmp.lt.s32.totalorder %v508, 2
    %vm510 = vcmp.eq.s32.totalorder %v508, 0
    %v511 = vxor.u32 %v506, 2147483648
    %v512 = vsel %vm510, %v505, %v511
    %vm513 = vcmp.eq.s32.totalorder %v508, 2
    %v514 = vxor.u32 %v505, 2147483648
    %v515 = vsel %vm513, %v514, %v506
    %v516 = vsel %vm509, %v512, %v515
    %v517 = vsel %vm507, nan, %v516
    %520 = vrot.lane.b32.xlu0 %v414, 16
    %v521 = vpop.permute.xlu0 %520
    %522 = vrot.lane.b32.xlu0 %v517, 16
    %v523 = vpop.permute.xlu0 %522
    %vm526 = vcmask 261248
    %527 = vst.msk [vmem:[#allocation2] sm:$0xff] %vm526, %v521
    %528 = vst.msk [vmem:[#allocation2 + $0x8] sm:$0xff] %vm526, %v523
    // Predicated region
    $region10: #{tpu_custom_call.1} parent=1 // pred_check
      _
    $region11: #{tpu_custom_call.1} parent=1 // pred_check_branch
      %530 = sbr.rel (0) target = $region13
    $region12: #{tpu_custom_call.1} parent=1 // pred_region
      %s532 = ssub.s32 256, 256
      %533 = vsyncadd [#allocation3], %s532
      %s534 = sshll.u32 [#allocation2], 4
      %s535 = int_to_ptr.vmem [resolvable:$true] %s534
      %540 = dma.vmem_to_hbm [thread:$0]  %s535, 256, %s2, [#allocation3], 128, 128, 8
    $region13: #{tpu_custom_call.1} parent=1 // pred_fallthru
      _
    // Predicated region
    $region14: #{tpu_custom_call.1} parent=1 // pred_check
      _
    $region15: #{tpu_custom_call.1} parent=1 // pred_check_branch
      %542 = sbr.rel (0) target = $region17
    $region16: #{tpu_custom_call.1} parent=1 // pred_region
      %543 = dma.done [#allocation3], 256
    $region17: #{tpu_custom_call.1} parent=1 // pred_fallthru
      _
    %544 = vsyncpa [#allocation3], 1

</llo_original>
